<compile_context>
chip_gen: v7x
topology: tpu7x:2x2x1
jax: 0.10.0
libtpu: 0.0.40
codegen_flags: <defaults>
</compile_context>

<pallas_src>
import jax
import jax.numpy as jnp
from jax.experimental import pallas as pl
from jax.experimental.pallas import tpu as pltpu

LANE = 128  # TPU lane width / MXU-friendly padding target


def _round_up(n, m):
    return ((n + m - 1) // m) * m


def _choose_b_tile(batch, seq, target_rows=2048, min_steps=8):
    """Pick the batch tile.

    - If the whole problem fits one target-sized tile (or the tile would exceed the
      batch), use the whole batch (single grid step; block dims equal full dims).
    - Otherwise use an 8-aligned batch tile with ~target_rows rows, shrunk (still
      8-aligned) so the grid has at least `min_steps` steps for pipelining /
      megacore; the wrapper zero-pads the batch to a multiple of the tile.
    """
    if batch * seq <= target_rows:
        return batch
    bt = max(8, (target_rows // max(seq, 1)) // 8 * 8)
    if bt >= batch:
        return batch
    while bt > 8 and _round_up(batch, bt) // bt < min_steps:
        bt -= 8
    return bt


def vanilla_model_kernel(x_ref, w1_ref, b1_ref, w2_ref, b2_ref, wh_ref, bh_ref,
                         span_ref, rel_ref):
    """One (B_TILE*S, D) token tile through the whole MLP.

    Weights are bf16 (lane-padded); x is cast to bf16 in-kernel.  Every dot
    accumulates in f32; bias-add / ReLU run in f32.  The two heads are fused into
    a single (d2p, 2*r_pad) matmul; only the first `num_relations` columns of each
    half are stored (narrow, unpadded outputs).
    """
    m_tile = x_ref.shape[0]
    b_tile, r_out = rel_ref.shape           # r_out = num_relations (unpadded)
    seq = m_tile // b_tile
    r_pad = wh_ref.shape[1] // 2             # lane-padded per-head width

    # In-kernel bf16 cast (saves a full HBM round-trip of x in the wrapper).
    x = x_ref[...].astype(jnp.bfloat16)

    # fc1 + ReLU
    h1 = jnp.dot(x, w1_ref[...], preferred_element_type=jnp.float32) + b1_ref[...]
    h1 = jnp.maximum(h1, 0.0).astype(jnp.bfloat16)

    # fc2 + ReLU
    h2 = jnp.dot(h1, w2_ref[...], preferred_element_type=jnp.float32) + b2_ref[...]
    h2 = jnp.maximum(h2, 0.0).astype(jnp.bfloat16)

    # fused heads: [span | pred], f32
    heads = jnp.dot(h2, wh_ref[...], preferred_element_type=jnp.float32) + bh_ref[...]

    # span head: store only the real columns (narrow masked store; vst slack is huge here)
    span_ref[...] = heads[:, :r_out].astype(span_ref.dtype)

    # pred head: max over the tile's sequence dim (torch.max(dim=1).values)
    # TODO(synk): if S % 8 != 0 this reshape forces a sublane relayout copy; pad S in the
    # wrapper or switch to a running-max fori_loop over pl.ds row slices in that case.
    rel = heads[:, r_pad:].reshape(b_tile, seq, r_pad)
    rel_ref[...] = jnp.max(rel, axis=1)[:, :r_out].astype(rel_ref.dtype)


def init_params(key, input_dim, num_relations):
    """Unpadded params, torch-equivalent but with weights stored as (in_dim, out_dim)."""
    d1, d2 = input_dim // 2, input_dim // 4
    ks = jax.random.split(key, 8)
    w1 = jax.random.normal(ks[0], (input_dim, d1), jnp.float32) * 0.1
    b1 = jax.random.normal(ks[1], (d1,), jnp.float32) * 0.1
    w2 = jax.random.normal(ks[2], (d1, d2), jnp.float32) * 0.1
    b2 = jax.random.normal(ks[3], (d2,), jnp.float32) * 0.1
    ws = jax.random.normal(ks[4], (d2, num_relations), jnp.float32) * 0.1
    bs = jax.random.normal(ks[5], (num_relations,), jnp.float32) * 0.1
    wp = jax.random.normal(ks[6], (d2, num_relations), jnp.float32) * 0.1
    bp = jax.random.normal(ks[7], (num_relations,), jnp.float32) * 0.1
    return (w1, b1, w2, b2, ws, bs, wp, bp)


def pack_params(params, input_dim, num_relations):
    """Zero-pad hidden/head dims to 128 lanes, fuse the two heads, cast weights to bf16."""
    w1, b1, w2, b2, ws, bs, wp, bp = params
    d1, d2 = input_dim // 2, input_dim // 4
    d1p, d2p = _round_up(d1, LANE), _round_up(d2, LANE)
    rp = _round_up(num_relations, LANE)

    def pad2(a, rows, cols):
        return jnp.pad(a, ((0, rows - a.shape[0]), (0, cols - a.shape[1])))

    w1p = pad2(w1, input_dim, d1p).astype(jnp.bfloat16)
    b1p = pad2(b1.reshape(1, -1), 1, d1p).astype(jnp.float32)
    w2p = pad2(w2, d1p, d2p).astype(jnp.bfloat16)
    b2p = pad2(b2.reshape(1, -1), 1, d2p).astype(jnp.float32)
    wh = jnp.concatenate([pad2(ws, d2p, rp), pad2(wp, d2p, rp)], axis=1).astype(jnp.bfloat16)
    bh = jnp.concatenate([pad2(bs.reshape(1, -1), 1, rp),
                          pad2(bp.reshape(1, -1), 1, rp)], axis=1).astype(jnp.float32)
    return (w1p, b1p, w2p, b2p, wh, bh)


def vanilla_model_forward(x, packed, num_relations):
    """x: (B, S, D) float32.  Returns (span_pred (B,S,R), relation_pred (B,R))."""
    w1, b1, w2, b2, wh, bh = packed
    B, S, D = x.shape

    b_tile = _choose_b_tile(B, S)
    B_pad = _round_up(B, b_tile)
    if B_pad != B:
        # zero-pad the batch so the tile divides it; padded rows are sliced off below
        x = jnp.pad(x, ((0, B_pad - B), (0, 0), (0, 0)))
    m_tile = b_tile * S
    grid = (B_pad // b_tile,)

    # Contiguous reshape is free; the f32->bf16 cast happens inside the kernel.
    x2 = x.reshape(B_pad * S, D)

    const = lambda i: (0, 0)

    span_flat, rel = pl.pallas_call(
        vanilla_model_kernel,
        out_shape=(
            jax.ShapeDtypeStruct((B_pad * S, num_relations), jnp.float32),
            jax.ShapeDtypeStruct((B_pad, num_relations), jnp.float32),
        ),
        grid=grid,
        in_specs=[
            pl.BlockSpec((m_tile, D), lambda i: (i, 0)),        # x streams over token tiles
            pl.BlockSpec((w1.shape[0], w1.shape[1]), const),     # weights: resident in VMEM
            pl.BlockSpec((1, b1.shape[1]), const),
            pl.BlockSpec((w2.shape[0], w2.shape[1]), const),
            pl.BlockSpec((1, b2.shape[1]), const),
            pl.BlockSpec((wh.shape[0], wh.shape[1]), const),
            pl.BlockSpec((1, bh.shape[1]), const),
        ],
        out_specs=(
            pl.BlockSpec((m_tile, num_relations), lambda i: (i, 0)),   # narrow span output
            pl.BlockSpec((b_tile, num_relations), lambda i: (i, 0)),   # narrow rel output
        ),
        compiler_params=pltpu.CompilerParams(
            dimension_semantics=("parallel",),     # shard batch tiles across TCs (v7x)
            vmem_limit_bytes=48 * 1024 * 1024,     # headroom even on v7x's 64 MiB VMEM
        ),
    )(x2, w1, b1, w2, b2, wh, bh)

    span_pred = span_flat.reshape(B_pad, S, num_relations)[:B]
    relation_pred = rel[:B]
    return span_pred, relation_pred


def reference_forward(x, params):
    """Pure-JAX reference replicating the kernel numerics: bf16 MXU operands,
    f32 accumulation, f32 bias-add/ReLU, bf16 feeds between layers."""
    w1, b1, w2, b2, ws, bs, wp, bp = params
    bf = lambda a: a.astype(jnp.bfloat16)
    h = jnp.maximum(jnp.dot(bf(x), bf(w1), preferred_element_type=jnp.float32) + b1, 0.0)
    h = jnp.maximum(jnp.dot(bf(h), bf(w2), preferred_element_type=jnp.float32) + b2, 0.0)
    hb = bf(h)
    span = jnp.dot(hb, bf(ws), preferred_element_type=jnp.float32) + bs
    rel = jnp.max(jnp.dot(hb, bf(wp), preferred_element_type=jnp.float32) + bp, axis=1)
    return span, rel


if __name__ == "__main__":
    B, S, D, R = 2, 8, 32, 4  # batch=2, seq=8, input_dim=32, num_relations=4

    key = jax.random.PRNGKey(0)
    kx, kp = jax.random.split(key)
    x = jax.random.normal(kx, (B, S, D), jnp.float32)
    params = init_params(kp, D, R)

    packed = pack_params(params, D, R)
    span_pred, relation_pred = vanilla_model_forward(x, packed, R)
    jax.block_until_ready((span_pred, relation_pred))

    span_ref, rel_ref = reference_forward(x, params)

    assert span_pred.shape == (B, S, R)
    assert relation_pred.shape == (B, R)
    assert jnp.allclose(span_pred, span_ref, atol=1e-3, rtol=1e-3)
    assert jnp.allclose(relation_pred, rel_ref, atol=1e-3, rtol=1e-3)

    print("KERNEL_OK")
</pallas_src>

<mosaic_0001>
module attributes {stable_mosaic.version = 11 : i64} {
  func.func @vanilla_model_kernel(%arg0: i32, %arg1: memref<16x32xf32, #tpu.memory_space<vmem>>, %arg2: memref<32x128xbf16, #tpu.memory_space<vmem>>, %arg3: memref<1x128xf32, #tpu.memory_space<vmem>>, %arg4: memref<128x128xbf16, #tpu.memory_space<vmem>>, %arg5: memref<1x128xf32, #tpu.memory_space<vmem>>, %arg6: memref<128x256xbf16, #tpu.memory_space<vmem>>, %arg7: memref<1x256xf32, #tpu.memory_space<vmem>>, %arg8: memref<16x4xf32, #tpu.memory_space<vmem>>, %arg9: memref<2x4xf32, #tpu.memory_space<vmem>>) attributes {dimension_semantics = [#tpu.dimension_semantics<parallel>], iteration_bounds = array<i64: 1>, scalar_prefetch = 0 : i64, scratch_operands = 0 : i64, tpu.core_type = #tpu.core_type<tc>, window_params = [{transform_indices = @transform_0, window_bounds = array<i64: 16, 32>}, {pipeline_mode = #tpu.pipeline_mode<synchronous>, transform_indices = @transform_1, window_bounds = array<i64: 32, 128>}, {pipeline_mode = #tpu.pipeline_mode<synchronous>, transform_indices = @transform_2, window_bounds = array<i64: 1, 128>}, {pipeline_mode = #tpu.pipeline_mode<synchronous>, transform_indices = @transform_3, window_bounds = array<i64: 128, 128>}, {pipeline_mode = #tpu.pipeline_mode<synchronous>, transform_indices = @transform_4, window_bounds = array<i64: 1, 128>}, {pipeline_mode = #tpu.pipeline_mode<synchronous>, transform_indices = @transform_5, window_bounds = array<i64: 128, 256>}, {pipeline_mode = #tpu.pipeline_mode<synchronous>, transform_indices = @transform_6, window_bounds = array<i64: 1, 256>}, {transform_indices = @transform_7, window_bounds = array<i64: 16, 4>}, {transform_indices = @transform_8, window_bounds = array<i64: 2, 4>}]} {
    %c0 = arith.constant 0 : index
    %c0_0 = arith.constant 0 : index
    %0 = vector.load %arg1[%c0, %c0_0] : memref<16x32xf32, #tpu.memory_space<vmem>>, vector<16x32xf32>
    %1 = arith.truncf %0 : vector<16x32xf32> to vector<16x32xbf16>
    %c0_1 = arith.constant 0 : index
    %c0_2 = arith.constant 0 : index
    %2 = vector.load %arg2[%c0_1, %c0_2] : memref<32x128xbf16, #tpu.memory_space<vmem>>, vector<32x128xbf16>
    %cst = arith.constant dense<0.000000e+00> : vector<16x128xf32>
    %3 = tpu.matmul %1, %2, %cst {dimension_numbers = #tpu.dot_dimension_numbers<[1], [0], [0], [1], [0, 0, 1, 1], [], []>} : vector<16x32xbf16>, vector<32x128xbf16>, vector<16x128xf32> -> vector<16x128xf32>
    %c0_3 = arith.constant 0 : index
    %c0_4 = arith.constant 0 : index
    %4 = vector.load %arg3[%c0_3, %c0_4] : memref<1x128xf32, #tpu.memory_space<vmem>>, vector<1x128xf32>
    %5 = vector.broadcast %4 : vector<1x128xf32> to vector<16x128xf32>
    %6 = arith.addf %3, %5 : vector<16x128xf32>
    %cst_5 = arith.constant 0.000000e+00 : f32
    %7 = vector.broadcast %cst_5 : f32 to vector<16x128xf32>
    %8 = arith.maximumf %6, %7 : vector<16x128xf32>
    %9 = arith.truncf %8 : vector<16x128xf32> to vector<16x128xbf16>
    %c0_6 = arith.constant 0 : index
    %c0_7 = arith.constant 0 : index
    %10 = vector.load %arg4[%c0_6, %c0_7] : memref<128x128xbf16, #tpu.memory_space<vmem>>, vector<128x128xbf16>
    %cst_8 = arith.constant dense<0.000000e+00> : vector<16x128xf32>
    %11 = tpu.matmul %9, %10, %cst_8 {dimension_numbers = #tpu.dot_dimension_numbers<[1], [0], [0], [1], [0, 0, 1, 1], [], []>} : vector<16x128xbf16>, vector<128x128xbf16>, vector<16x128xf32> -> vector<16x128xf32>
    %c0_9 = arith.constant 0 : index
    %c0_10 = arith.constant 0 : index
    %12 = vector.load %arg5[%c0_9, %c0_10] : memref<1x128xf32, #tpu.memory_space<vmem>>, vector<1x128xf32>
    %13 = vector.broadcast %12 : vector<1x128xf32> to vector<16x128xf32>
    %14 = arith.addf %11, %13 : vector<16x128xf32>
    %cst_11 = arith.constant 0.000000e+00 : f32
    %15 = vector.broadcast %cst_11 : f32 to vector<16x128xf32>
    %16 = arith.maximumf %14, %15 : vector<16x128xf32>
    %17 = arith.truncf %16 : vector<16x128xf32> to vector<16x128xbf16>
    %c0_12 = arith.constant 0 : index
    %c0_13 = arith.constant 0 : index
    %18 = vector.load %arg6[%c0_12, %c0_13] : memref<128x256xbf16, #tpu.memory_space<vmem>>, vector<128x256xbf16>
    %cst_14 = arith.constant dense<0.000000e+00> : vector<16x256xf32>
    %19 = tpu.matmul %17, %18, %cst_14 {dimension_numbers = #tpu.dot_dimension_numbers<[1], [0], [0], [1], [0, 0, 1, 1], [], []>} : vector<16x128xbf16>, vector<128x256xbf16>, vector<16x256xf32> -> vector<16x256xf32>
    %c0_15 = arith.constant 0 : index
    %c0_16 = arith.constant 0 : index
    %20 = vector.load %arg7[%c0_15, %c0_16] : memref<1x256xf32, #tpu.memory_space<vmem>>, vector<1x256xf32>
    %21 = vector.broadcast %20 : vector<1x256xf32> to vector<16x256xf32>
    %22 = arith.addf %19, %21 : vector<16x256xf32>
    %23 = vector.extract_strided_slice %22 {offsets = [0, 0], sizes = [16, 4], strides = [1, 1]} : vector<16x256xf32> to vector<16x4xf32>
    %c0_17 = arith.constant 0 : index
    %c0_18 = arith.constant 0 : index
    %24 = vector.load %arg8[%c0_17, %c0_18] : memref<16x4xf32, #tpu.memory_space<vmem>>, vector<16x4xf32>
    tpu.vector_store %arg8[%c0_17, %c0_18], %23 {strides = array<i32>} : memref<16x4xf32, #tpu.memory_space<vmem>>, vector<16x4xf32>,
    %25 = vector.extract_strided_slice %22 {offsets = [0, 128], sizes = [16, 128], strides = [1, 1]} : vector<16x256xf32> to vector<16x128xf32>
    %26 = vector.shape_cast %25 : vector<16x128xf32> to vector<2x8x128xf32>
    %cst_19 = arith.constant dense<0xFF800000> : vector<2x128xf32>
    %27 = vector.multi_reduction <maximumf>, %26, %cst_19 [1] : vector<2x8x128xf32> to vector<2x128xf32>
    %28 = vector.extract_strided_slice %27 {offsets = [0, 0], sizes = [2, 4], strides = [1, 1]} : vector<2x128xf32> to vector<2x4xf32>
    %c0_20 = arith.constant 0 : index
    %c0_21 = arith.constant 0 : index
    %29 = vector.load %arg9[%c0_20, %c0_21] : memref<2x4xf32, #tpu.memory_space<vmem>>, vector<2x4xf32>
    tpu.vector_store %arg9[%c0_20, %c0_21], %28 {strides = array<i32>} : memref<2x4xf32, #tpu.memory_space<vmem>>, vector<2x4xf32>,
    return
  }
  func.func @transform_0(%arg0: i32) -> (i32, i32) {
    %c0_i32 = arith.constant 0 : i32
    %c0_i32_0 = arith.constant 0 : i32
    return %arg0, %c0_i32 : i32, i32
  }
  func.func @transform_1(%arg0: i32) -> (i32, i32) {
    %c0_i32 = arith.constant 0 : i32
    %c0_i32_0 = arith.constant 0 : i32
    %c0_i32_1 = arith.constant 0 : i32
    return %c0_i32, %c0_i32_0 : i32, i32
  }
  func.func @transform_2(%arg0: i32) -> (i32, i32) {
    %c0_i32 = arith.constant 0 : i32
    %c0_i32_0 = arith.constant 0 : i32
    %c0_i32_1 = arith.constant 0 : i32
    return %c0_i32, %c0_i32_0 : i32, i32
  }
  func.func @transform_3(%arg0: i32) -> (i32, i32) {
    %c0_i32 = arith.constant 0 : i32
    %c0_i32_0 = arith.constant 0 : i32
    %c0_i32_1 = arith.constant 0 : i32
    return %c0_i32, %c0_i32_0 : i32, i32
  }
  func.func @transform_4(%arg0: i32) -> (i32, i32) {
    %c0_i32 = arith.constant 0 : i32
    %c0_i32_0 = arith.constant 0 : i32
    %c0_i32_1 = arith.constant 0 : i32
    return %c0_i32, %c0_i32_0 : i32, i32
  }
  func.func @transform_5(%arg0: i32) -> (i32, i32) {
    %c0_i32 = arith.constant 0 : i32
    %c0_i32_0 = arith.constant 0 : i32
    %c0_i32_1 = arith.constant 0 : i32
    return %c0_i32, %c0_i32_0 : i32, i32
  }
  func.func @transform_6(%arg0: i32) -> (i32, i32) {
    %c0_i32 = arith.constant 0 : i32
    %c0_i32_0 = arith.constant 0 : i32
    %c0_i32_1 = arith.constant 0 : i32
    return %c0_i32, %c0_i32_0 : i32, i32
  }
  func.func @transform_7(%arg0: i32) -> (i32, i32) {
    %c0_i32 = arith.constant 0 : i32
    %c0_i32_0 = arith.constant 0 : i32
    return %arg0, %c0_i32 : i32, i32
  }
  func.func @transform_8(%arg0: i32) -> (i32, i32) {
    %c0_i32 = arith.constant 0 : i32
    %c0_i32_0 = arith.constant 0 : i32
    return %arg0, %c0_i32 : i32, i32
  }
}

</mosaic_0001>

<llo_original>
// kernel: tpu_custom_call.1
$region0: #{tpu_custom_call.1}
  #allocation0 [shape = 'u32[]', space=smem, size = 0x4, offset = 0x4, fixed_abs, tag = 'smem constant byte address 0x4 - core index']
  #allocation1 [shape = 'u32[144,128]{1,0:T(1,128)}', space=vmem, size = 0x12000, scoped, tag = 'internal scratch']
  %s0 = inlined_call_operand.hbm [shape: f32[16,32], index: 0, kind: input, shape index: {}]
  %s1 = inlined_call_operand.hbm [shape: bf16[32,128], index: 1, kind: input, shape index: {}]
  %s2 = inlined_call_operand.vmem [shape: f32[1,128], index: 2, kind: input, shape index: {}]
  %s3 = inlined_call_operand.hbm [shape: bf16[128,128], index: 3, kind: input, shape index: {}]
  %s4 = inlined_call_operand.vmem [shape: f32[1,128], index: 4, kind: input, shape index: {}]
  %s5 = inlined_call_operand.hbm [shape: bf16[128,256], index: 5, kind: input, shape index: {}]
  %s6 = inlined_call_operand.vmem [shape: f32[1,256], index: 6, kind: input, shape index: {}]
  %s7 = inlined_call_operand.vmem [shape: f32[16,4], index: 7, kind: output, shape index: {0}]
  %s8 = inlined_call_operand.hbm [shape: f32[2,4], index: 8, kind: output, shape index: {1}]
  %9 = xla_tuple %s7, %s8
  %s10 = sld [smem:[#allocation0]]
  $region62: #{tpu_custom_call.1} parent=0
    _
  %s12 = ssub.s32 1, %s10
  %s13 = scalar_select 0, %s12, %s10
  $region1: #{tpu_custom_call.1} parent=0
    #allocation2 [shape = 'u8[8192]{0}', space=vmem, size = 0x2000, scoped, tag = 'input window, operand 0, single buffered']
    #allocation3 [shape = 's32[1]{0}', space=sflag, size = 0x4, scoped, tag = 'scoped memory for tpu_custom_call.1']
    #allocation4 [shape = 's32[1]{0}', space=sflag, size = 0x4, scoped, tag = 'scoped memory for tpu_custom_call.1']
    #allocation5 [shape = 'u8[8192]{0}', space=vmem, size = 0x2000, scoped, tag = 'input window, operand 1, single buffered']
    #allocation6 [shape = 's32[1]{0}', space=sflag, size = 0x4, scoped, tag = 'scoped memory for tpu_custom_call.1']
    #allocation7 [shape = 'u8[32768]{0}', space=vmem, size = 0x8000, scoped, tag = 'input window, operand 3, single buffered']
    #allocation8 [shape = 'u8[65536]{0}', space=vmem, size = 0x10000, scoped, tag = 'input window, operand 5, single buffered']
    #allocation9 [shape = 's32[1]{0}', space=sflag, size = 0x4, scoped, tag = 'scoped memory for tpu_custom_call.1']
    #allocation10 [shape = 'u8[1024]{0}', space=vmem, size = 0x400, scoped, tag = 'output window, operand 1, single buffered']
    %14 = vsyncpa [#allocation3], 0
    %15 = vsyncpa [#allocation6], 0
    %16 = vsyncpa [#allocation9], 0
    %17 = vsyncpa [#allocation4], 0
    // Predicated region
    $region2: #{tpu_custom_call.1} parent=1 // pred_check
      _
    $region3: #{tpu_custom_call.1} parent=1 // pred_check_branch
      %19 = sbr.rel (0) target = $region5
    $region4: #{tpu_custom_call.1} parent=1 // pred_region
      %s21 = ssub.s32 256, 256
      %22 = vsyncadd [#allocation3], %s21
      %s23 = sshll.u32 [#allocation2], 4
      %s24 = int_to_ptr.vmem [resolvable:$true] %s23
      %29 = dma.hbm_to_vmem [thread:$0]  %s0, 256, %s24, [#allocation3], 128, 128, 8
    $region5: #{tpu_custom_call.1} parent=1 // pred_fallthru
      _
    // Predicated region
    $region6: #{tpu_custom_call.1} parent=1 // pred_check
      _
    $region7: #{tpu_custom_call.1} parent=1 // pred_check_branch
      %31 = sbr.rel (0) target = $region9
    $region8: #{tpu_custom_call.1} parent=1 // pred_region
      %s33 = ssub.s32 256, 256
      %34 = vsyncadd [#allocation6], %s33
      %s35 = sshll.u32 [#allocation5], 4
      %s36 = int_to_ptr.vmem [resolvable:$true] %s35
      %41 = dma.hbm_to_vmem [thread:$0]  %s1, 256, %s36, [#allocation6], 64, 64, 4
    $region9: #{tpu_custom_call.1} parent=1 // pred_fallthru
      _
    // Predicated region
    $region10: #{tpu_custom_call.1} parent=1 // pred_check
      _
    $region11: #{tpu_custom_call.1} parent=1 // pred_check_branch
      %43 = sbr.rel (0) target = $region13
    $region12: #{tpu_custom_call.1} parent=1 // pred_region
      _
    $region13: #{tpu_custom_call.1} parent=1 // pred_fallthru
      _
    // Predicated region
    $region14: #{tpu_custom_call.1} parent=1 // pred_check
      _
    $region15: #{tpu_custom_call.1} parent=1 // pred_check_branch
      %45 = sbr.rel (0) target = $region17
    $region16: #{tpu_custom_call.1} parent=1 // pred_region
      %s47 = ssub.s32 1024, 1024
      %48 = vsyncadd [#allocation6], %s47
      %s49 = sshll.u32 [#allocation7], 4
      %s50 = int_to_ptr.vmem [resolvable:$true] %s49
      %55 = dma.hbm_to_vmem [thread:$0]  %s3, 1024, %s50, [#allocation6], 64, 64, 4
    $region17: #{tpu_custom_call.1} parent=1 // pred_fallthru
      _
    // Predicated region
    $region18: #{tpu_custom_call.1} parent=1 // pred_check
      _
    $region19: #{tpu_custom_call.1} parent=1 // pred_check_branch
      %57 = sbr.rel (0) target = $region21
    $region20: #{tpu_custom_call.1} parent=1 // pred_region
      _
    $region21: #{tpu_custom_call.1} parent=1 // pred_fallthru
      _
    // Predicated region
    $region22: #{tpu_custom_call.1} parent=1 // pred_check
      _
    $region23: #{tpu_custom_call.1} parent=1 // pred_check_branch
      %59 = sbr.rel (0) target = $region25
    $region24: #{tpu_custom_call.1} parent=1 // pred_region
      %s61 = ssub.s32 2048, 2048
      %62 = vsyncadd [#allocation9], %s61
      %s63 = sshll.u32 [#allocation8], 4
      %s64 = int_to_ptr.vmem [resolvable:$true] %s63
      %69 = dma.hbm_to_vmem [thread:$0]  %s5, 2048, %s64, [#allocation9], 128, 128, 8
    $region25: #{tpu_custom_call.1} parent=1 // pred_fallthru
      _
    // Predicated region
    $region26: #{tpu_custom_call.1} parent=1 // pred_check
      _
    $region27: #{tpu_custom_call.1} parent=1 // pred_check_branch
      %71 = sbr.rel (0) target = $region29
    $region28: #{tpu_custom_call.1} parent=1 // pred_region
      _
    $region29: #{tpu_custom_call.1} parent=1 // pred_fallthru
      _
    // Predicated region
    $region30: #{tpu_custom_call.1} parent=1 // pred_check
      _
    $region31: #{tpu_custom_call.1} parent=1 // pred_check_branch
      %73 = sbr.rel (0) target = $region33
    $region32: #{tpu_custom_call.1} parent=1 // pred_region
      %74 = dma.done [#allocation3], 256
    $region33: #{tpu_custom_call.1} parent=1 // pred_fallthru
      _
    // Predicated region
    $region34: #{tpu_custom_call.1} parent=1 // pred_check
      _
    $region35: #{tpu_custom_call.1} parent=1 // pred_check_branch
      %76 = sbr.rel (0) target = $region37
    $region36: #{tpu_custom_call.1} parent=1 // pred_region
      %77 = dma.done [#allocation6], 256
    $region37: #{tpu_custom_call.1} parent=1 // pred_fallthru
      _
    // Predicated region
    $region38: #{tpu_custom_call.1} parent=1 // pred_check
      _
    $region39: #{tpu_custom_call.1} parent=1 // pred_check_branch
      %79 = sbr.rel (0) target = $region41
    $region40: #{tpu_custom_call.1} parent=1 // pred_region
      %80 = dma.done [#allocation6], 1024
    $region41: #{tpu_custom_call.1} parent=1 // pred_fallthru
      _
    // Predicated region
    $region42: #{tpu_custom_call.1} parent=1 // pred_check
      _
    $region43: #{tpu_custom_call.1} parent=1 // pred_check_branch
      %82 = sbr.rel (0) target = $region45
    $region44: #{tpu_custom_call.1} parent=1 // pred_region
      %83 = dma.done [#allocation9], 2048
    $region45: #{tpu_custom_call.1} parent=1 // pred_fallthru
      _
    %v85 = vld [vmem:[#allocation2] sm:$0xff]
    %v86 = vld [vmem:[#allocation2 + $0x8] sm:$0xff]
    %v87 = vpack.c.bf16 %v86, %v85
    %v88 = vld [vmem:[#allocation5] sm:$0xf]
    %v89 = vld [vmem:[#allocation5 + $0x4] sm:$0xf]
    %v90 = vld [vmem:[#allocation5 + $0x8] sm:$0xf]
    %v91 = vld [vmem:[#allocation5 + $0xc] sm:$0xf]
    %v92 = vld [vmem:[%s2] sm:$0x1]
    %v94 = vlaneseq
    %v95 = vshrl.u32 %v94, 7
    %v96 = vsub.s32 0, %v95
    %v97 = vrot.slane %v92, %v96
    %v103 = vunpack.c.l.b16 %v88
    %v104 = vunpack.c.l.b16 %v89
    %v105 = vunpack.c.l.b16 %v90
    %v106 = vunpack.c.l.b16 %v91
    %v107 = vpack.c.b16 %v104, %v103
    %v108 = vpack.c.b16 %v106, %v105
    %vm111 = vcmask 261120
    %v113 = vsel %vm111, %v87, 0
    %115 = vmatprep.subr.bf16.mxu0 0
    %116 = vmatpush1.bf16.msra.mxu0 %v107
    %117 = vmatprep.subr.bf16.mxu0 0
    %118 = vmatpush1.bf16.msra.mxu0 %v108
    %119 = vmatprep.subr.bf16.mxu0 0
    %120 = vmatpush1.bf16.msra.mxu0 0
    %121 = vmatprep.subr.bf16.mxu0 0
    %122 = vmatpush1.bf16.msra.mxu0 0
    %123 = vmatprep.subr.bf16.mxu0 0
    %124 = vmatpush1.bf16.msra.mxu0 0
    %125 = vmatprep.subr.bf16.mxu0 0
    %126 = vmatpush1.bf16.msra.mxu0 0
    %127 = vmatprep.subr.bf16.mxu0 0
    %128 = vmatpush1.bf16.msra.mxu0 0
    %129 = vmatprep.subr.bf16.mxu0 0
    %130 = vmatpush1.bf16.msra.mxu0 0
    %131 = vmatprep.subr.bf16.mxu0 0
    %132 = vmatpush1.bf16.msra.mxu0 0
    %133 = vmatprep.subr.bf16.mxu0 0
    %134 = vmatpush1.bf16.msra.mxu0 0
    %135 = vmatprep.subr.bf16.mxu0 0
    %136 = vmatpush1.bf16.msra.mxu0 0
    %137 = vmatprep.subr.bf16.mxu0 0
    %138 = vmatpush1.bf16.msra.mxu0 0
    %139 = vmatprep.subr.bf16.mxu0 0
    %140 = vmatpush1.bf16.msra.mxu0 0
    %141 = vmatprep.subr.bf16.mxu0 0
    %142 = vmatpush1.bf16.msra.mxu0 0
    %143 = vmatprep.subr.bf16.mxu0 0
    %144 = vmatpush1.bf16.msra.mxu0 0
    %145 = vmatprep.subr.bf16.mxu0 0
    %146 = vmatpush1.bf16.msra.mxu0 0
    %147 = vmatprep.mubr.bf16.mxu0 0
    %148 = vmatmul.mubr.bf16.gmra.mrb[0].mxu0 %v113
    %v149 = vpop.f32.mrb[0].mxu0
    %v150 = vadd.f32 %v97, %v149
    %v151 = vpop.f32.mrb[0].mxu0
    %v152 = vpop.f32.mrb[0].mxu0
    %v153 = vadd.f32 %v97, %v152
    %v154 = vpop.f32.mrb[0].mxu0
    %155 = vdwg.mxu0
    %v156 = vmax.f32 %v150, 0.0
    %v157 = vmax.f32 %v153, 0.0
    %v158 = vpack.c.bf16 %v157, %v156
    %v159 = vld [vmem:[#allocation7] sm:$0xf]
    %v160 = vld [vmem:[#allocation7 + $0x4] sm:$0xf]
    %v161 = vld [vmem:[#allocation7 + $0x8] sm:$0xf]
    %v162 = vld [vmem:[#allocation7 + $0xc] sm:$0xf]
    %v163 = vld [vmem:[#allocation7 + $0x10] sm:$0xf]
    %v164 = vld [vmem:[#allocation7 + $0x14] sm:$0xf]
    %v165 = vld [vmem:[#allocation7 + $0x18] sm:$0xf]
    %v166 = vld [vmem:[#allocation7 + $0x1c] sm:$0xf]
    %v167 = vld [vmem:[#allocation7 + $0x20] sm:$0xf]
    %v168 = vld [vmem:[#allocation7 + $0x24] sm:$0xf]
    %v169 = vld [vmem:[#allocation7 + $0x28] sm:$0xf]
    %v170 = vld [vmem:[#allocation7 + $0x2c] sm:$0xf]
    %v171 = vld [vmem:[#allocation7 + $0x30] sm:$0xf]
    %v172 = vld [vmem:[#allocation7 + $0x34] sm:$0xf]
    %v173 = vld [vmem:[#allocation7 + $0x38] sm:$0xf]
    %v174 = vld [vmem:[#allocation7 + $0x3c] sm:$0xf]
    %v175 = vld [vmem:[%s4] sm:$0x1]
    %v177 = vlaneseq
    %v178 = vshrl.u32 %v177, 7
    %v179 = vsub.s32 0, %v178
    %v180 = vrot.slane %v175, %v179
    %v198 = vunpack.c.l.b16 %v159
    %v199 = vunpack.c.l.b16 %v160
    %v200 = vunpack.c.l.b16 %v161
    %v201 = vunpack.c.l.b16 %v162
    %v202 = vunpack.c.l.b16 %v163
    %v203 = vunpack.c.l.b16 %v164
    %v204 = vunpack.c.l.b16 %v165
    %v205 = vunpack.c.l.b16 %v166
    %v206 = vunpack.c.l.b16 %v167
    %v207 = vunpack.c.l.b16 %v168
    %v208 = vunpack.c.l.b16 %v169
    %v209 = vunpack.c.l.b16 %v170
    %v210 = vunpack.c.l.b16 %v171
    %v211 = vunpack.c.l.b16 %v172
    %v212 = vunpack.c.l.b16 %v173
    %v213 = vunpack.c.l.b16 %v174
    %v214 = vpack.c.b16 %v199, %v198
    %v215 = vpack.c.b16 %v201, %v200
    %v216 = vpack.c.b16 %v203, %v202
    %v217 = vpack.c.b16 %v205, %v204
    %v218 = vpack.c.b16 %v207, %v206
    %v219 = vpack.c.b16 %v209, %v208
    %v220 = vpack.c.b16 %v211, %v210
    %v221 = vpack.c.b16 %v213, %v212
    %230 = vmatprep.subr.bf16.mxu0 0
    %231 = vmatpush1.bf16.msra.mxu0 %v214
    %232 = vmatprep.subr.bf16.mxu0 0
    %233 = vmatpush1.bf16.msra.mxu0 %v215
    %234 = vmatprep.subr.bf16.mxu0 0
    %235 = vmatpush1.bf16.msra.mxu0 %v216
    %236 = vmatprep.subr.bf16.mxu0 0
    %237 = vmatpush1.bf16.msra.mxu0 %v217
    %238 = vmatprep.subr.bf16.mxu0 0
    %239 = vmatpush1.bf16.msra.mxu0 %v218
    %240 = vmatprep.subr.bf16.mxu0 0
    %241 = vmatpush1.bf16.msra.mxu0 %v219
    %242 = vmatprep.subr.bf16.mxu0 0
    %243 = vmatpush1.bf16.msra.mxu0 %v220
    %244 = vmatprep.subr.bf16.mxu0 0
    %245 = vmatpush1.bf16.msra.mxu0 %v221
    %246 = vmatprep.subr.bf16.mxu0 0
    %247 = vmatpush1.bf16.msra.mxu0 0
    %248 = vmatprep.subr.bf16.mxu0 0
    %249 = vmatpush1.bf16.msra.mxu0 0
    %250 = vmatprep.subr.bf16.mxu0 0
    %251 = vmatpush1.bf16.msra.mxu0 0
    %252 = vmatprep.subr.bf16.mxu0 0
    %253 = vmatpush1.bf16.msra.mxu0 0
    %254 = vmatprep.subr.bf16.mxu0 0
    %255 = vmatpush1.bf16.msra.mxu0 0
    %256 = vmatprep.subr.bf16.mxu0 0
    %257 = vmatpush1.bf16.msra.mxu0 0
    %258 = vmatprep.subr.bf16.mxu0 0
    %259 = vmatpush1.bf16.msra.mxu0 0
    %260 = vmatprep.subr.bf16.mxu0 0
    %261 = vmatpush1.bf16.msra.mxu0 0
    %262 = vmatprep.mubr.bf16.mxu0 0
    %263 = vmatmul.mubr.bf16.gmra.mrb[0].mxu0 %v158
    %v264 = vpop.f32.mrb[0].mxu0
    %v265 = vadd.f32 %v180, %v264
    %v266 = vpop.f32.mrb[0].mxu0
    %v267 = vpop.f32.mrb[0].mxu0
    %v268 = vadd.f32 %v180, %v267
    %v269 = vpop.f32.mrb[0].mxu0
    %270 = vdwg.mxu0
    %v271 = vmax.f32 %v265, 0.0
    %v272 = vmax.f32 %v268, 0.0
    %v273 = vpack.c.bf16 %v272, %v271
    %v274 = vld [vmem:[#allocation8] sm:$0xff]
    %v275 = vld [vmem:[#allocation8 + $0x8] sm:$0xff]
    %v276 = vld [vmem:[#allocation8 + $0x10] sm:$0xff]
    %v277 = vld [vmem:[#allocation8 + $0x18] sm:$0xff]
    %v278 = vld [vmem:[#allocation8 + $0x20] sm:$0xff]
    %v279 = vld [vmem:[#allocation8 + $0x28] sm:$0xff]
    %v280 = vld [vmem:[#allocation8 + $0x30] sm:$0xff]
    %v281 = vld [vmem:[#allocation8 + $0x38] sm:$0xff]
    %v282 = vld [vmem:[#allocation8 + $0x40] sm:$0xff]
    %v283 = vld [vmem:[#allocation8 + $0x48] sm:$0xff]
    %v284 = vld [vmem:[#allocation8 + $0x50] sm:$0xff]
    %v285 = vld [vmem:[#allocation8 + $0x58] sm:$0xff]
    %v286 = vld [vmem:[#allocation8 + $0x60] sm:$0xff]
    %v287 = vld [vmem:[#allocation8 + $0x68] sm:$0xff]
    %v288 = vld [vmem:[#allocation8 + $0x70] sm:$0xff]
    %v289 = vld [vmem:[#allocation8 + $0x78] sm:$0xff]
    %v290 = vld [vmem:[%s6] sm:$0x3]
    %v292 = vlaneseq
    %v293 = vshrl.u32 %v292, 7
    %v294 = vsub.s32 0, %v293
    %v295 = vrot.slane %v290, %v294
    %v296 = vlaneseq
    %v297 = vshrl.u32 %v296, 7
    %v298 = vsub.s32 1, %v297
    %v299 = vrot.slane %v290, %v298
    %v318 = vunpack.c.l.b16 %v274
    %v319 = vunpack.c.h.b16 %v274
    %v320 = vunpack.c.l.b16 %v275
    %v321 = vunpack.c.h.b16 %v275
    %v322 = vunpack.c.l.b16 %v276
    %v323 = vunpack.c.h.b16 %v276
    %v324 = vunpack.c.l.b16 %v277
    %v325 = vunpack.c.h.b16 %v277
    %v326 = vunpack.c.l.b16 %v278
    %v327 = vunpack.c.h.b16 %v278
    %v328 = vunpack.c.l.b16 %v279
    %v329 = vunpack.c.h.b16 %v279
    %v330 = vunpack.c.l.b16 %v280
    %v331 = vunpack.c.h.b16 %v280
    %v332 = vunpack.c.l.b16 %v281
    %v333 = vunpack.c.h.b16 %v281
    %v334 = vunpack.c.l.b16 %v282
    %v335 = vunpack.c.h.b16 %v282
    %v336 = vunpack.c.l.b16 %v283
    %v337 = vunpack.c.h.b16 %v283
    %v338 = vunpack.c.l.b16 %v284
    %v339 = vunpack.c.h.b16 %v284
    %v340 = vunpack.c.l.b16 %v285
    %v341 = vunpack.c.h.b16 %v285
    %v342 = vunpack.c.l.b16 %v286
    %v343 = vunpack.c.h.b16 %v286
    %v344 = vunpack.c.l.b16 %v287
    %v345 = vunpack.c.h.b16 %v287
    %v346 = vunpack.c.l.b16 %v288
    %v347 = vunpack.c.h.b16 %v288
    %v348 = vunpack.c.l.b16 %v289
    %v349 = vunpack.c.h.b16 %v289
    %v350 = vpack.c.b16 %v320, %v318
    %v351 = vpack.c.b16 %v321, %v319
    %v352 = vpack.c.b16 %v324, %v322
    %v353 = vpack.c.b16 %v325, %v323
    %v354 = vpack.c.b16 %v328, %v326
    %v355 = vpack.c.b16 %v329, %v327
    %v356 = vpack.c.b16 %v332, %v330
    %v357 = vpack.c.b16 %v333, %v331
    %v358 = vpack.c.b16 %v336, %v334
    %v359 = vpack.c.b16 %v337, %v335
    %v360 = vpack.c.b16 %v340, %v338
    %v361 = vpack.c.b16 %v341, %v339
    %v362 = vpack.c.b16 %v344, %v342
    %v363 = vpack.c.b16 %v345, %v343
    %v364 = vpack.c.b16 %v348, %v346
    %v365 = vpack.c.b16 %v349, %v347
    %382 = vmatprep.subr.bf16.mxu0 %v351
    %383 = vmatpush1.bf16.msra.mxu0 %v350
    %384 = vmatprep.subr.bf16.mxu0 %v353
    %385 = vmatpush1.bf16.msra.mxu0 %v352
    %386 = vmatprep.subr.bf16.mxu0 %v355
    %387 = vmatpush1.bf16.msra.mxu0 %v354
    %388 = vmatprep.subr.bf16.mxu0 %v357
    %389 = vmatpush1.bf16.msra.mxu0 %v356
    %390 = vmatprep.subr.bf16.mxu0 %v359
    %391 = vmatpush1.bf16.msra.mxu0 %v358
    %392 = vmatprep.subr.bf16.mxu0 %v361
    %393 = vmatpush1.bf16.msra.mxu0 %v360
    %394 = vmatprep.subr.bf16.mxu0 %v363
    %395 = vmatpush1.bf16.msra.mxu0 %v362
    %396 = vmatprep.subr.bf16.mxu0 %v365
    %397 = vmatpush1.bf16.msra.mxu0 %v364
    %398 = vmatprep.subr.bf16.mxu0 0
    %399 = vmatpush1.bf16.msra.mxu0 0
    %400 = vmatprep.subr.bf16.mxu0 0
    %401 = vmatpush1.bf16.msra.mxu0 0
    %402 = vmatprep.subr.bf16.mxu0 0
    %403 = vmatpush1.bf16.msra.mxu0 0
    %404 = vmatprep.subr.bf16.mxu0 0
    %405 = vmatpush1.bf16.msra.mxu0 0
    %406 = vmatprep.subr.bf16.mxu0 0
    %407 = vmatpush1.bf16.msra.mxu0 0
    %408 = vmatprep.subr.bf16.mxu0 0
    %409 = vmatpush1.bf16.msra.mxu0 0
    %410 = vmatprep.subr.bf16.mxu0 0
    %411 = vmatpush1.bf16.msra.mxu0 0
    %412 = vmatprep.subr.bf16.mxu0 0
    %413 = vmatpush1.bf16.msra.mxu0 0
    %414 = vmatprep.mubr.bf16.mxu0 0
    %415 = vmatmul.mubr.bf16.gmra.mrb[0].mxu0 %v273
    %v416 = vpop.f32.mrb[0].mxu0
    %v417 = vadd.f32 %v295, %v416
    %v418 = vpop.f32.mrb[0].mxu0
    %v419 = vadd.f32 %v299, %v418
    %v420 = vpop.f32.mrb[0].mxu0
    %v421 = vadd.f32 %v295, %v420
    %v422 = vpop.f32.mrb[0].mxu0
    %v423 = vadd.f32 %v299, %v422
    %424 = vdwg.mxu0
    %vm425 = vcmask 31744
    %426 = vst.msk [vmem:[%s7] sm:$0xff] %vm425, %v417
    %427 = vst.msk [vmem:[%s7 + $0x8] sm:$0xff] %vm425, %v421
    %v428 = vrot.slane %v419, 4
    %v429 = vmax.f32 %v419, %v428
    %v430 = vrot.slane %v429, 2
    %v431 = vmax.f32 %v429, %v430
    %v432 = vrot.slane %v431, 1
    %v433 = vmax.f32 %v431, %v432
    %v434 = vrot.slane %v423, 4
    %v435 = vmax.f32 %v423, %v434
    %v436 = vrot.slane %v435, 2
    %v437 = vmax.f32 %v435, %v436
    %v438 = vrot.slane %v437, 1
    %v439 = vmax.f32 %v437, %v438
    %vm442 = vcmask 1041409
    %v443 = vsel %vm442, %v439, %v433
    %vm445 = vcmask 25600
    %446 = vst.msk [vmem:[#allocation10] sm:$0x3] %vm445, %v443
    // Predicated region
    $region46: #{tpu_custom_call.1} parent=1 // pred_check
      _
    $region47: #{tpu_custom_call.1} parent=1 // pred_check_branch
      %448 = sbr.rel (0) target = $region49
    $region48: #{tpu_custom_call.1} parent=1 // pred_region
      _
    $region49: #{tpu_custom_call.1} parent=1 // pred_fallthru
      _
    // Predicated region
    $region50: #{tpu_custom_call.1} parent=1 // pred_check
      _
    $region51: #{tpu_custom_call.1} parent=1 // pred_check_branch
      %450 = sbr.rel (0) target = $region53
    $region52: #{tpu_custom_call.1} parent=1 // pred_region
      %s452 = ssub.s32 32, 32
      %453 = vsyncadd [#allocation4], %s452
      %s455 = sshll.u32 [#allocation10], 4
      %s456 = int_to_ptr.vmem [resolvable:$true] %s455
      %458 = dma.vmem_to_hbm [thread:$0]  %s456, 32, %s8, [#allocation4]
    $region53: #{tpu_custom_call.1} parent=1 // pred_fallthru
      _
    // Predicated region
    $region54: #{tpu_custom_call.1} parent=1 // pred_check
      _
    $region55: #{tpu_custom_call.1} parent=1 // pred_check_branch
      %460 = sbr.rel (0) target = $region57
    $region56: #{tpu_custom_call.1} parent=1 // pred_region
      _
    $region57: #{tpu_custom_call.1} parent=1 // pred_fallthru
      _
    // Predicated region
    $region58: #{tpu_custom_call.1} parent=1 // pred_check
      _
    $region59: #{tpu_custom_call.1} parent=1 // pred_check_branch
      %462 = sbr.rel (0) target = $region61
    $region60: #{tpu_custom_call.1} parent=1 // pred_region
      %463 = dma.done [#allocation4], 32
    $region61: #{tpu_custom_call.1} parent=1 // pred_fallthru
      _
    %464 = vsyncpa [#allocation3], 1
    %465 = vsyncpa [#allocation6], 1
    %466 = vsyncpa [#allocation9], 1
    %467 = vsyncpa [#allocation4], 1

</llo_original>
